<compile_context>
chip_gen: v5e
topology: v5e:2x2
jax: 0.10.0
libtpu: 0.0.40
codegen_flags: <defaults>
</compile_context>

<pallas_src>
import functools

import jax
import jax.numpy as jnp
from jax.experimental import pallas as pl
from jax.experimental.pallas import tpu as pltpu


def _round_up(a: int, b: int) -> int:
    return (a + b - 1) // b * b


def _cdiv(a: int, b: int) -> int:
    return (a + b - 1) // b


def _vmem_capacity_bytes() -> int:
    """Per-generation VMEM capacity (v5e/v6e: 128 MiB, v7x: 64 MiB per TensorCore)."""
    try:
        return int(pltpu.get_tpu_info().vmem_capacity_bytes)
    except Exception:
        return 64 * 2**20  # conservative fallback = v7x per-TC size


def _vmem_footprint_bytes(tm: int, d: int, ep: int, in_bytes: int, out_bytes: int) -> int:
    """Scoped-VMEM footprint of one pipelined step (double-buffered tiles + weight)."""
    d_lane = _round_up(d, 128)   # activation tile lane padding in VMEM
    d_sub = _round_up(d, 8)      # weight sublane padding in VMEM
    return (2 * tm * d_lane * in_bytes       # xp tile, double-buffered
            + 2 * tm * ep * out_bytes        # output tile, double-buffered
            + 2 * d_sub * ep * in_bytes      # weight (constant index map -> DMA'd once,
                                             #         but 2 buffers still allocated)
            + 2 * 8 * ep * 4)                # bias row


def _pick_m_tile(M: int, d: int, ep: int, in_bytes: int, out_bytes: int,
                 m_tile: int, vmem_cap: int) -> int:
    tm = min(m_tile, _round_up(M, 8))
    if M >= 16:
        # Keep at least 2 grid steps so the "parallel" M axis gives both v7x cores work.
        tm = min(tm, _round_up(_cdiv(M, 2), 8))
    tm = max(tm, 8)
    # Prefer a tile that divides M exactly: no M padding and no post-kernel slice copy.
    if M % 8 == 0:
        for t in range(tm, max(8, tm // 2) - 1, -8):
            if M % t == 0:
                tm = t
                break
    # Auto-shrink until the double-buffered footprint fits comfortably (v7x: 64 MiB/TC).
    while tm > 8 and _vmem_footprint_bytes(tm, d, ep, in_bytes, out_bytes) > 0.45 * vmem_cap:
        tm = max(8, _round_up(tm // 2, 8))
    return tm


def _patch_embed_kernel(xp_ref, w_ref, b_ref, o_ref):
    # xp_ref: (TM, D) operands (f32/bf16)   VMEM
    # w_ref : (D, Ep) operands              VMEM (constant index map -> fetched once)
    # b_ref : (1, Ep) f32                   VMEM
    # o_ref : (TM, Ep) out_dtype            VMEM (lane-dense: Ep % 128 == 0)
    acc = jnp.dot(xp_ref[...], w_ref[...], preferred_element_type=jnp.float32)
    o_ref[...] = (acc + b_ref[...]).astype(o_ref.dtype)


def prepare_params(weight, bias, *, compute_dtype=None):
    """One-time (model-load) parameter transform, hoisted out of the per-call path.

    weight: (E, C, P, P) Conv2d weight -> (D, Ep) matmul operand, D = C*P*P,
            Ep = round_up(E, 128) (lane-dense output stores), rows in (c, ph, pw) order.
    bias:   (E,)                        -> (1, Ep) float32 row (bias add stays f32).
    compute_dtype=jnp.bfloat16 halves weight/activation HBM bytes on all generations
    (v5e/v6e/v7x: the matmul is MXU bf16-native; accumulation stays f32).
    """
    E = weight.shape[0]
    D = weight.shape[1] * weight.shape[2] * weight.shape[3]
    Ep = _round_up(E, 128)
    w = jnp.transpose(weight.reshape(E, D))                # (D, E)
    w = jnp.pad(w, ((0, 0), (0, Ep - E)))
    if compute_dtype is not None:
        w = w.astype(compute_dtype)
    b = jnp.pad(bias.astype(jnp.float32), (0, Ep - E)).reshape(1, Ep)
    return w, b


@functools.partial(
    jax.jit,
    static_argnames=("patch_size", "embed_dim", "m_tile", "out_dtype", "min_pallas_outputs"))
def patch_embedding(x, w, bias_row, *, patch_size, embed_dim, m_tile=512,
                    out_dtype=None, min_pallas_outputs=65536):
    """Forward pass of PatchEmbedding.

    x:        (B, C, H, W) images, or (B, N, D) pre-patchified activations (patch order
              row-major (hp, wp), feature order (c, ph, pw)).  Supplying the latter from
              the upstream producer removes the patchify HBM round trip entirely.
    w:        (D, Ep) from prepare_params; its dtype sets the operand/compute dtype.
    bias_row: (1, Ep) float32 from prepare_params.
    Returns (B, N, embed_dim) in out_dtype (default: x.dtype).
    """
    P = patch_size
    E = embed_dim
    D, Ep = w.shape
    assert Ep % 128 == 0 and Ep >= E and bias_row.shape == (1, Ep)
    out_dtype = x.dtype if out_dtype is None else out_dtype
    compute_dtype = w.dtype

    if x.ndim == 4:
        B, C, H, W = x.shape
        Hp, Wp = H // P, W // P
        N = Hp * Wp
        assert C * P * P == D
        # Patchify glue: a single fused XLA copy under jit (read x once, write xp once).
        # TODO(synk): fuse into the kernel once Mosaic handles the (W,) -> (Wp, P)
        # lane->sublane relayout for unaligned shapes (see header comment).
        xp = (x.reshape(B, C, Hp, P, Wp, P)
                .transpose(0, 2, 4, 1, 3, 5)
                .reshape(B * N, D))
    else:
        B, N, _ = x.shape
        assert x.shape[-1] == D
        xp = x.reshape(B * N, D)
    M = B * N
    xp = xp.astype(compute_dtype)

    if M * E < min_pallas_outputs:
        # Tiny problems: fixed pallas_call + glue cost dominates; let XLA fuse a plain dot.
        out = (jnp.dot(xp, w, preferred_element_type=jnp.float32) + bias_row).astype(out_dtype)
    else:
        in_b = jnp.dtype(compute_dtype).itemsize
        out_b = jnp.dtype(out_dtype).itemsize
        vmem_cap = _vmem_capacity_bytes()
        TM = _pick_m_tile(M, D, Ep, in_b, out_b, m_tile, vmem_cap)
        Mp = _round_up(M, TM)
        if Mp != M:
            xp = jnp.pad(xp, ((0, Mp - M), (0, 0)))     # fused with the patchify copy

        footprint = _vmem_footprint_bytes(TM, D, Ep, in_b, out_b)
        vmem_limit = int(min(0.9 * vmem_cap, max(1.5 * footprint, 32 * 2**20)))

        out = pl.pallas_call(
            _patch_embed_kernel,
            out_shape=jax.ShapeDtypeStruct((Mp, Ep), out_dtype),
            grid_spec=pltpu.PrefetchScalarGridSpec(
                num_scalar_prefetch=0,
                grid=(Mp // TM,),
                in_specs=[
                    # (TM, D): unpadded contraction dim -- a block dim equal to the full
                    # array dim is legal even when not a multiple of 128 (VMEM pads lanes).
                    pl.BlockSpec((TM, D), lambda i: (i, 0)),
                    # Constant index maps -> weight/bias DMA'd once across the grid.
                    # (pipeline_mode=pl.Buffered(1) would drop their unused 2nd buffer;
                    # left at the default since there is ample VMEM headroom at these sizes.)
                    pl.BlockSpec((D, Ep), lambda i: (0, 0)),
                    pl.BlockSpec((1, Ep), lambda i: (0, 0)),
                ],
                out_specs=pl.BlockSpec((TM, Ep), lambda i: (i, 0)),  # lane-dense stores
            ),
            compiler_params=pltpu.CompilerParams(
                dimension_semantics=("parallel",),      # megacore shards the M tiles
                vmem_limit_bytes=vmem_limit,
            ),
        )(xp, w, bias_row)

    if out.shape[0] != M or Ep != E:
        out = out[:M, :E]        # only taken when padding was actually added
    return out.reshape(B, N, E)


def reference_patch_embedding(x, weight, bias, patch_size):
    """Pure-JAX reference: nn.Conv2d(stride=kernel=P) -> flatten(2) -> transpose(1, 2)."""
    out = jax.lax.conv_general_dilated(
        x, weight,
        window_strides=(patch_size, patch_size),
        padding="VALID",
        dimension_numbers=("NCHW", "OIHW", "NCHW"),
    )  # (B, E, Hp, Wp)
    B, E, Hp, Wp = out.shape
    out = out + bias.reshape(1, E, 1, 1)
    return out.reshape(B, E, Hp * Wp).transpose(0, 2, 1)   # (B, N, E)


if __name__ == "__main__":
    # Module defaults: image_size=28, patch_size=7, in_channels=1, embed_dim=64.
    image_size, patch_size, in_channels, embed_dim = 28, 7, 1, 64
    batch = 2

    key = jax.random.PRNGKey(0)
    kx, kw, kb = jax.random.split(key, 3)

    x = jax.random.normal(kx, (batch, in_channels, image_size, image_size), dtype=jnp.float32)

    # Deterministic parameter init (kaiming-uniform-ish bounds like nn.Conv2d default).
    fan_in = in_channels * patch_size * patch_size
    bound = float(1.0 / (fan_in ** 0.5))
    weight = jax.random.uniform(
        kw, (embed_dim, in_channels, patch_size, patch_size),
        minval=-bound, maxval=bound, dtype=jnp.float32)
    bias = jax.random.uniform(kb, (embed_dim,), minval=-bound, maxval=bound, dtype=jnp.float32)

    ref = reference_patch_embedding(x, weight, bias, patch_size)
    num_patches = (image_size // patch_size) ** 2

    # f32 path (module numerics).  min_pallas_outputs=0 forces the Pallas kernel even at
    # this tiny demo size (the default threshold would dispatch to the fused XLA dot).
    w_f32, b_row = prepare_params(weight, bias)
    out = jax.block_until_ready(
        patch_embedding(x, w_f32, b_row, patch_size=patch_size, embed_dim=embed_dim,
                        min_pallas_outputs=0))
    assert out.shape == (batch, num_patches, embed_dim), out.shape
    assert jnp.allclose(out, ref, atol=1e-4, rtol=1e-4), float(jnp.max(jnp.abs(out - ref)))

    # bf16 operands + bf16 output (valid on v5e/v6e/v7x; f32 accumulation + f32 bias add).
    w_bf16, b_row_bf16 = prepare_params(weight, bias, compute_dtype=jnp.bfloat16)
    out_bf16 = jax.block_until_ready(
        patch_embedding(x, w_bf16, b_row_bf16, patch_size=patch_size, embed_dim=embed_dim,
                        out_dtype=jnp.bfloat16, min_pallas_outputs=0))
    assert out_bf16.shape == (batch, num_patches, embed_dim), out_bf16.shape
    assert out_bf16.dtype == jnp.bfloat16
    assert jnp.allclose(out_bf16.astype(jnp.float32), ref, atol=1e-1, rtol=1e-1), \
        float(jnp.max(jnp.abs(out_bf16.astype(jnp.float32) - ref)))

    # Pre-patchified (B, N, D) input path (removes the patchify HBM round trip upstream).
    Hp = Wp = image_size // patch_size
    x_pre = (x.reshape(batch, in_channels, Hp, patch_size, Wp, patch_size)
               .transpose(0, 2, 4, 1, 3, 5)
               .reshape(batch, num_patches, in_channels * patch_size * patch_size))
    out_pre = jax.block_until_ready(
        patch_embedding(x_pre, w_f32, b_row, patch_size=patch_size, embed_dim=embed_dim,
                        min_pallas_outputs=0))
    assert jnp.allclose(out_pre, ref, atol=1e-4, rtol=1e-4)

    # Auto-dispatch path: below the size threshold the plain fused XLA dot is used.
    out_auto = jax.block_until_ready(
        patch_embedding(x, w_f32, b_row, patch_size=patch_size, embed_dim=embed_dim))
    assert jnp.allclose(out_auto, ref, atol=1e-4, rtol=1e-4)

    print("KERNEL_OK")
</pallas_src>

<mosaic_0001>
module attributes {stable_mosaic.version = 11 : i64} {
  func.func @_patch_embed_kernel(%arg0: i32, %arg1: memref<16x49xf32, #tpu.memory_space<vmem>>, %arg2: memref<49x128xf32, #tpu.memory_space<vmem>>, %arg3: memref<1x128xf32, #tpu.memory_space<vmem>>, %arg4: memref<16x128xf32, #tpu.memory_space<vmem>>) attributes {dimension_semantics = [#tpu.dimension_semantics<parallel>], iteration_bounds = array<i64: 2>, scalar_prefetch = 0 : i64, scratch_operands = 0 : i64, tpu.core_type = #tpu.core_type<tc>, window_params = [{transform_indices = @transform_0, window_bounds = array<i64: 16, 49>}, {pipeline_mode = #tpu.pipeline_mode<synchronous>, transform_indices = @transform_1, window_bounds = array<i64: 49, 128>}, {pipeline_mode = #tpu.pipeline_mode<synchronous>, transform_indices = @transform_2, window_bounds = array<i64: 1, 128>}, {transform_indices = @transform_3, window_bounds = array<i64: 16, 128>}]} {
    %c0 = arith.constant 0 : index
    %c0_0 = arith.constant 0 : index
    %0 = vector.load %arg1[%c0, %c0_0] : memref<16x49xf32, #tpu.memory_space<vmem>>, vector<16x49xf32>
    %c0_1 = arith.constant 0 : index
    %c0_2 = arith.constant 0 : index
    %1 = vector.load %arg2[%c0_1, %c0_2] : memref<49x128xf32, #tpu.memory_space<vmem>>, vector<49x128xf32>
    %cst = arith.constant dense<0.000000e+00> : vector<16x128xf32>
    %2 = tpu.matmul %0, %1, %cst {dimension_numbers = #tpu.dot_dimension_numbers<[1], [0], [0], [1], [0, 0, 1, 1], [], []>} : vector<16x49xf32>, vector<49x128xf32>, vector<16x128xf32> -> vector<16x128xf32>
    %c0_3 = arith.constant 0 : index
    %c0_4 = arith.constant 0 : index
    %3 = vector.load %arg3[%c0_3, %c0_4] : memref<1x128xf32, #tpu.memory_space<vmem>>, vector<1x128xf32>
    %4 = vector.broadcast %3 : vector<1x128xf32> to vector<16x128xf32>
    %5 = arith.addf %2, %4 : vector<16x128xf32>
    %c0_5 = arith.constant 0 : index
    %c0_6 = arith.constant 0 : index
    %6 = vector.load %arg4[%c0_5, %c0_6] : memref<16x128xf32, #tpu.memory_space<vmem>>, vector<16x128xf32>
    tpu.vector_store %arg4[%c0_5, %c0_6], %5 {strides = array<i32>} : memref<16x128xf32, #tpu.memory_space<vmem>>, vector<16x128xf32>,
    return
  }
  func.func @transform_0(%arg0: i32) -> (i32, i32) {
    %c0_i32 = arith.constant 0 : i32
    %c0_i32_0 = arith.constant 0 : i32
    return %arg0, %c0_i32 : i32, i32
  }
  func.func @transform_1(%arg0: i32) -> (i32, i32) {
    %c0_i32 = arith.constant 0 : i32
    %c0_i32_0 = arith.constant 0 : i32
    %c0_i32_1 = arith.constant 0 : i32
    return %c0_i32, %c0_i32_0 : i32, i32
  }
  func.func @transform_2(%arg0: i32) -> (i32, i32) {
    %c0_i32 = arith.constant 0 : i32
    %c0_i32_0 = arith.constant 0 : i32
    %c0_i32_1 = arith.constant 0 : i32
    return %c0_i32, %c0_i32_0 : i32, i32
  }
  func.func @transform_3(%arg0: i32) -> (i32, i32) {
    %c0_i32 = arith.constant 0 : i32
    %c0_i32_0 = arith.constant 0 : i32
    return %arg0, %c0_i32 : i32, i32
  }
}

</mosaic_0001>

<llo_original>
// kernel: patch_embedding.1
$region0: #{patch_embedding.1}
  #allocation0 [shape = 'u32[]', space=smem, size = 0x4, offset = 0x4, fixed_abs, tag = 'smem constant byte address 0x4 - core index']
  #allocation1 [shape = 'u32[72,128]{1,0:T(1,128)}', space=vmem, size = 0x9000, scoped, tag = 'internal scratch']
  %s0 = inlined_call_operand.vmem [shape: f32[32,49], index: 0, kind: input, shape index: {}]
  %s1 = inlined_call_operand.vmem [shape: f32[49,128], index: 1, kind: input, shape index: {}]
  %s2 = inlined_call_operand.vmem [shape: f32[1,128], index: 2, kind: input, shape index: {}]
  %s3 = inlined_call_operand.hbm [shape: f32[32,128], index: 3, kind: output, shape index: {}]
  %s4 = sld [smem:[#allocation0]]
  $region45: #{patch_embedding.1} parent=0
    _
  %s6 = ssub.s32 1, %s4
  %s7 = scalar_select 0, %s6, %s4
  $region1: #{patch_embedding.1} parent=0
    #allocation2 [shape = 'u8[16384]{0}', space=vmem, size = 0x4000, scoped, tag = 'output window, operand 0']
    #allocation3 [shape = 's32[2]{0}', space=sflag, size = 0x8, scoped, tag = 'scoped memory for patch_embedding.1']
    %8 = vsyncpa [#allocation3], 0
    %s9 = scalar_lea.sflag [#allocation3], 1
    %10 = vsyncpa %s9, 0
    loop: start=0, step=1, limit=4
    $region2: #{patch_embedding.1} parent=1 // loop_pre_header
      _
    $region3: #{patch_embedding.1} parent=1 // loop_header
      %s12 = sphi 0, %s16
      %p13 = scmp.ge.s32.totalorder %s12, 4
      %s22 = sphi 0, %s24
      %s25 = sphi 0, %s22
      %s26 = sphi 0, %s25
      %s42 = sphi 0, %s26
      %s46 = sphi 0, %s46
      %s48 = sphi 0, %s46
      %s49 = sphi 0, %s48
      %s63 = sphi 0, %s49
      %s67 = sphi 0, %s67
      %s69 = sphi 0, %s67
      %s70 = sphi 0, %s69
      %s84 = sphi 0, %s70
      %s90 = sphi 0, %s92
      %s93 = sphi 0, %s90
      %s94 = sphi 0, %s93
      %s110 = sphi 0, %s94
    $region4: #{patch_embedding.1} parent=1 // loop_header_branch
      %15 = sbr.rel (%p13) target = $region8
    $region5: #{patch_embedding.1} parent=1 // loop_body
      %s17 = ssub.s32 %s12, 1
      %s18 = ssub.s32 %s12, 2
      %s19 = sadd.s32 %s12, 1
      %s20 = ssub.s32 %s12, %s19
      %p21 = scmp.eq.s32.totalorder %s20, 0
      %s23 = sadd.s32 %s22, 1
      %s24 = scalar_select %p21, %s22, %s23
      %p27 = pneg %p21
      %p28 = scmp.eq.s32.totalorder %s12, 1
      %p29 = por %p27, %p28
      %p30 = scmp.ne.s32.totalorder %s22, %s25
      %p31 = scmp.eq.s32.totalorder %s12, 0
      %p32 = por %p30, %p31
      %p33 = scmp.ne.s32.totalorder %s22, %s25
      %p34 = scmp.eq.s32.totalorder %s17, 1
      %p35 = por %p33, %p34
      %p36 = scmp.ne.s32.totalorder %s25, %s26
      %p37 = scmp.eq.s32.totalorder %s17, 0
      %p38 = por %p36, %p37
      %p39 = scmp.ne.s32.totalorder %s25, %s26
      %p40 = scmp.eq.s32.totalorder %s18, 1
      %p41 = por %p39, %p40
      %p43 = scmp.ne.s32.totalorder %s26, %s42
      %p44 = scmp.eq.s32.totalorder %s18, 0
      %p45 = por %p43, %p44
      %s47 = sadd.s32 %s46, 1
      %p50 = scmp.eq.s32.totalorder %s12, 1
      %p51 = scmp.ne.s32.totalorder %s46, %s48
      %p52 = scmp.eq.s32.totalorder %s12, 0
      %p53 = por %p51, %p52
      %p54 = scmp.ne.s32.totalorder %s46, %s48
      %p55 = scmp.eq.s32.totalorder %s17, 1
      %p56 = por %p54, %p55
      %p57 = scmp.ne.s32.totalorder %s48, %s49
      %p58 = scmp.eq.s32.totalorder %s17, 0
      %p59 = por %p57, %p58
      %p60 = scmp.ne.s32.totalorder %s48, %s49
      %p61 = scmp.eq.s32.totalorder %s18, 1
      %p62 = por %p60, %p61
      %p64 = scmp.ne.s32.totalorder %s49, %s63
      %p65 = scmp.eq.s32.totalorder %s18, 0
      %p66 = por %p64, %p65
      %s68 = sadd.s32 %s67, 1
      %p71 = scmp.eq.s32.totalorder %s12, 1
      %p72 = scmp.ne.s32.totalorder %s67, %s69
      %p73 = scmp.eq.s32.totalorder %s12, 0
      %p74 = por %p72, %p73
      %p75 = scmp.ne.s32.totalorder %s67, %s69
      %p76 = scmp.eq.s32.totalorder %s17, 1
      %p77 = por %p75, %p76
      %p78 = scmp.ne.s32.totalorder %s69, %s70
      %p79 = scmp.eq.s32.totalorder %s17, 0
      %p80 = por %p78, %p79
      %p81 = scmp.ne.s32.totalorder %s69, %s70
      %p82 = scmp.eq.s32.totalorder %s18, 1
      %p83 = por %p81, %p82
      %p85 = scmp.ne.s32.totalorder %s70, %s84
      %p86 = scmp.eq.s32.totalorder %s18, 0
      %p87 = por %p85, %p86
      %s88 = ssub.s32 %s12, %s19
      %p89 = scmp.eq.s32.totalorder %s88, 0
      %s91 = sadd.s32 %s90, 1
      %s92 = scalar_select %p89, %s90, %s91
      %p95 = pneg %p89
      %p96 = scmp.eq.s32.totalorder %s12, 1
      %p97 = por %p95, %p96
      %p98 = scmp.ne.s32.totalorder %s90, %s93
      %p99 = scmp.eq.s32.totalorder %s12, 0
      %p100 = por %p98, %p99
      %p101 = scmp.ne.s32.totalorder %s90, %s93
      %p102 = scmp.eq.s32.totalorder %s17, 1
      %p103 = por %p101, %p102
      %p104 = scmp.ne.s32.totalorder %s93, %s94
      %p105 = scmp.eq.s32.totalorder %s17, 0
      %p106 = por %p104, %p105
      %p107 = scmp.ne.s32.totalorder %s93, %s94
      %p108 = scmp.eq.s32.totalorder %s18, 1
      %p109 = por %p107, %p108
      %p111 = scmp.ne.s32.totalorder %s94, %s110
      %p112 = scmp.eq.s32.totalorder %s18, 0
      %p113 = por %p111, %p112
      %p114 = scmp.le.s32.totalorder 1, %s12
      %p115 = scmp.lt.s32.totalorder %s12, 3
      %p116 = pnand %p114, %p115
      %p117 = pneg %p116
      // Predicated region
      $region9: #{patch_embedding.1} parent=5 // pred_check
        _
      $region10: #{patch_embedding.1} parent=5 // pred_check_branch
        %119 = sbr.rel (%p116) target = $region12
      $region11: #{patch_embedding.1} parent=5 // pred_region
        %s120 = ssub.s32 %s12, 1
        // Predicated region
        $region13: #{patch_embedding.1} parent=11 // pred_check
          %p121 = pneg %p59
        $region14: #{patch_embedding.1} parent=11 // pred_check_branch
          %123 = sbr.rel (%p121) target = $region16
        $region15: #{patch_embedding.1} parent=11 // pred_region
          _
        $region16: #{patch_embedding.1} parent=11 // pred_fallthru
          _
        // Predicated region
        $region17: #{patch_embedding.1} parent=11 // pred_check
          %p124 = pneg %p80
        $region18: #{patch_embedding.1} parent=11 // pred_check_branch
          %126 = sbr.rel (%p124) target = $region20
        $region19: #{patch_embedding.1} parent=11 // pred_region
          _
        $region20: #{patch_embedding.1} parent=11 // pred_fallthru
          _
      $region12: #{patch_embedding.1} parent=5 // pred_fallthru
        _
      %p127 = scmp.lt.s32.totalorder %s12, 2
      // Predicated region
      $region21: #{patch_embedding.1} parent=5 // pred_check
        %p128 = pneg %p127
      $region22: #{patch_embedding.1} parent=5 // pred_check_branch
        %130 = sbr.rel (%p128) target = $region24
      $region23: #{patch_embedding.1} parent=5 // pred_region
        // Predicated region
        $region25: #{patch_embedding.1} parent=23 // pred_check
          %p131 = pneg %p32
        $region26: #{patch_embedding.1} parent=23 // pred_check_branch
          %133 = sbr.rel (%p131) target = $region28
        $region27: #{patch_embedding.1} parent=23 // pred_region
          %s134 = smul.u32 2, %s12
          %p135 = scmp.lt.s32.totalorder %s134, 3
          %s136 = scalar_select %p135, %s134, 3
          %s137 = smul.addr %s136, 8
          %s138 = scalar_lea.vmem %s0, %s137
          %s139 = smul.u32 2, %s12
        $region28: #{patch_embedding.1} parent=23 // pred_fallthru
          _
      $region24: #{patch_embedding.1} parent=5 // pred_fallthru
        _
      %p140 = scmp.le.s32.totalorder 1, %s12
      %p141 = scmp.lt.s32.totalorder %s12, 3
      %p142 = pnand %p140, %p141
      %p143 = pneg %p142
      // Predicated region
      $region29: #{patch_embedding.1} parent=5 // pred_check
        _
      $region30: #{patch_embedding.1} parent=5 // pred_check_branch
        %145 = sbr.rel (%p142) target = $region32
      $region31: #{patch_embedding.1} parent=5 // pred_region
        %s146 = ssub.s32 %s12, 1
        %s147 = smul.u32 2, %s17
        %p148 = scmp.lt.s32.totalorder %s147, 3
        %s149 = scalar_select %p148, %s147, 3
        %s150 = smul.addr %s149, 8
        %s151 = scalar_lea.vmem %s0, %s150
        %p152 = pneg %p38
        %p153 = pneg %p35
        %p154 = pneg %p59
        %p155 = pneg %p56
        %p156 = pneg %p80
        %p157 = pneg %p77
        %p158 = pneg %p106
        %p159 = pneg %p103
        %s160 = sand.u32 %s93, 1
        %s161 = scalar_lea.sflag [#allocation3], %s160
        %s162 = sand.u32 %s93, 1
        %s163 = smul.addr %s162, 16
        %s164 = scalar_lea.vmem [#allocation2], %s163
        %s165 = smul.u32 2, %s17
        %p166 = scmp.lt.s32.totalorder %s165, 3
        %s167 = scalar_select %p166, %s165, 3
        %s168 = smul.addr %s167, 8
        %s169 = scalar_lea.vmem %s0, %s168
        %s170 = smul.u32 2, %s17
        %s171 = smul.u32 2, %s17
        %v172 = vld [vmem:[%s169] sm:$0xff]
        %v173 = vld [vmem:[%s169 + $0x8] sm:$0xff]
        %v174 = vld [vmem:[%s1] sm:$0xff]
        %v175 = vld [vmem:[%s1 + $0x8] sm:$0xff]
        %v176 = vld [vmem:[%s1 + $0x10] sm:$0xff]
        %v177 = vld [vmem:[%s1 + $0x18] sm:$0xff]
        %v178 = vld [vmem:[%s1 + $0x20] sm:$0xff]
        %v179 = vld [vmem:[%s1 + $0x28] sm:$0xff]
        %v180 = vld [vmem:[%s1 + $0x30] sm:$0x1]
        %v181 = vld [vmem:[%s2] sm:$0x1]
        %v183 = vperm.slane %v181, 0
        %vm185 = vcmask 400384
        %v187 = vsel %vm185, %v172, 0
        %v190 = vsel %vm185, %v173, 0
        %vm192 = vcmask 1040384
        %v194 = vsel %vm192, %v180, 0
        %196 = vmatpush.msra.mxu0 0.0
        %197 = vmatpush.msra.mxu0 0.0
        %198 = vmatpush.msra.mxu0 0.0
        %199 = vmatpush.msra.mxu0 0.0
        %200 = vmatpush.msra.mxu0 0.0
        %201 = vmatpush.msra.mxu0 0.0
        %202 = vmatpush.msra.mxu0 0.0
        %203 = vmatpush.msra.mxu0 0.0
        %204 = vmatpush.msra.mxu0 0.0
        %205 = vmatpush.msra.mxu0 %v194
        %206 = vmatpush.msra.mxu0 %v179
        %207 = vmatpush.msra.mxu0 %v178
        %208 = vmatpush.msra.mxu0 %v177
        %209 = vmatpush.msra.mxu0 %v176
        %210 = vmatpush.msra.mxu0 %v175
        %211 = vmatpush.msra.mxu0 %v174
        %212 = vmatmul.f32.gmra.mxu0 %v187
        %v213 = vpop.f32.mrf.mxu0
        %v214 = vadd.f32 %v183, %v213
        %215 = vmatmul.f32.gmra.mxu0 %v190
        %v216 = vpop.f32.mrf.mxu0
        %v217 = vadd.f32 %v183, %v216
        %218 = vdwg.mxu0
        %219 = vst [vmem:[%s164] sm:$0xff] %v214
        %220 = vst [vmem:[%s164 + $0x8] sm:$0xff] %v217
        %s221 = sand.u32 %s93, 1
        %s222 = scalar_lea.sflag [#allocation3], %s221
        %s223 = sand.u32 %s93, 1
        %s224 = smul.addr %s223, 16
        %s225 = scalar_lea.vmem [#allocation2], %s224
        // Predicated region
        $region33: #{patch_embedding.1} parent=31 // pred_check
          %p226 = pneg %p103
        $region34: #{patch_embedding.1} parent=31 // pred_check_branch
          %228 = sbr.rel (%p226) target = $region36
        $region35: #{patch_embedding.1} parent=31 // pred_region
          %s229 = smul.u32 2, %s17
          %231 = vsyncadd %s222, 0
          %s232 = smul.addr %s229, 8
          %s233 = scalar_lea.hbm %s3, %s232
          %s234 = sshll.u32 %s225, 4
          %s235 = int_to_ptr.vmem [resolvable:$true] %s234
          %s236 = sshll.u32 %s233, 4
          %s237 = int_to_ptr.hbm [resolvable:$true] %s236
          %242 = dma.vmem_to_hbm [thread:$0]  %s235, 256, %s237, %s222, 128, 128, 8
        $region36: #{patch_embedding.1} parent=31 // pred_fallthru
          _
      $region32: #{patch_embedding.1} parent=5 // pred_fallthru
        _
      %p243 = scmp.le.s32.totalorder 2, %s12
      // Predicated region
      $region37: #{patch_embedding.1} parent=5 // pred_check
        %p244 = pneg %p243
      $region38: #{patch_embedding.1} parent=5 // pred_check_branch
        %246 = sbr.rel (%p244) target = $region40
      $region39: #{patch_embedding.1} parent=5 // pred_region
        %s247 = ssub.s32 %s12, 2
        // Predicated region
        $region41: #{patch_embedding.1} parent=39 // pred_check
          %p248 = pneg %p109
        $region42: #{patch_embedding.1} parent=39 // pred_check_branch
          %250 = sbr.rel (%p248) target = $region44
        $region43: #{patch_embedding.1} parent=39 // pred_region
          %s251 = sand.u32 %s94, 1
          %s252 = scalar_lea.sflag [#allocation3], %s251
          %s253 = sand.u32 %s94, 1
          %s254 = smul.addr %s253, 16
          %s255 = scalar_lea.vmem [#allocation2], %s254
          %257 = dma.done %s252, 256
        $region44: #{patch_embedding.1} parent=39 // pred_fallthru
          _
      $region40: #{patch_embedding.1} parent=5 // pred_fallthru
        _
    $region6: #{patch_embedding.1} parent=1 // loop_footer
      %s16 = sadd.s32 1, %s12
    $region7: #{patch_embedding.1} parent=1 // loop_footer_branch
      %11 = sbr.rel target = $region3
    $region8: #{patch_embedding.1} parent=1 // loop_exit
      _
    %258 = vsyncpa [#allocation3], 1
    %s259 = scalar_lea.sflag [#allocation3], 1
    %260 = vsyncpa %s259, 1

</llo_original>
